<compile_context>
chip_gen: v6e
topology: v6e:2x2x1
jax: 0.10.0
libtpu: 0.0.40
codegen_flags: <defaults>
</compile_context>

<pallas_src>
import jax
import jax.numpy as jnp
from jax import lax
from jax.experimental import pallas as pl
from jax.experimental.pallas import tpu as pltpu

EPS = 1e-5


def resblock_kernel(x_ref, w1_ref, w2_ref, p_ref, o_ref):
    """Fused fc1 -> BN1 -> ReLU -> fc2 -> BN2 (training-mode BN, batch stats).

    x_ref:  [N, S]  bf16
    w1_ref: [S, S]  bf16, pre-transposed (in, out)
    w2_ref: [S, S]  bf16, pre-transposed (in, out)
    p_ref:  [8, S]  f32 packed per-feature params:
            row 0 = gamma1, 1 = beta1, 2 = gamma2, 3 = beta2 (rows 4..7 unused)
    o_ref:  [N, S]  f32
    """
    g1, be1 = p_ref[0:1, :], p_ref[1:2, :]
    g2, be2 = p_ref[2:3, :], p_ref[3:4, :]

    inv_n = 1.0 / x_ref.shape[0]

    # fc1 on the MXU (bias dropped: exactly cancelled by BN mean subtraction).
    h = jnp.dot(x_ref[...], w1_ref[...], preferred_element_type=jnp.float32)

    # BN1: one-pass stats, folded into per-feature scale/shift.
    s1 = jnp.sum(h, axis=0, keepdims=True)
    q1 = jnp.sum(h * h, axis=0, keepdims=True)
    mean1 = s1 * inv_n
    var1 = jnp.maximum(q1 * inv_n - mean1 * mean1, 0.0)
    scale1 = g1 * lax.rsqrt(var1 + EPS)          # rsqrt -> EUP slot (free)
    shift1 = be1 - mean1 * scale1
    h = jnp.maximum(h * scale1 + shift1, 0.0)    # BN1 + ReLU fused

    # fc2 on the MXU, bf16 operands, f32 accumulation (bias dropped likewise).
    h2 = jnp.dot(h.astype(jnp.bfloat16), w2_ref[...],
                 preferred_element_type=jnp.float32)

    # BN2: same folded form.
    s2 = jnp.sum(h2, axis=0, keepdims=True)
    q2 = jnp.sum(h2 * h2, axis=0, keepdims=True)
    mean2 = s2 * inv_n
    var2 = jnp.maximum(q2 * inv_n - mean2 * mean2, 0.0)
    scale2 = g2 * lax.rsqrt(var2 + EPS)
    shift2 = be2 - mean2 * scale2
    o_ref[...] = (h2 * scale2 + shift2).astype(o_ref.dtype)


def prepare_resblock_params(w1, w2, g1, be1, g2, be2):
    """One-time, out-of-hot-path prep: transpose weights to (in, out), cast to
    bf16, and pack the BN affine vectors into a single (8, S) f32 tile.
    Linear biases are intentionally omitted (cancelled by training-mode BN)."""
    S = w1.shape[0]
    w1t = jnp.asarray(w1.T, dtype=jnp.bfloat16)
    w2t = jnp.asarray(w2.T, dtype=jnp.bfloat16)
    packed = (jnp.zeros((8, S), jnp.float32)
              .at[0].set(g1).at[1].set(be1).at[2].set(g2).at[3].set(be2))
    return w1t, w2t, packed


def resblock_forward(x, w1t, w2t, packed):
    """x: [N, S]; w1t/w2t: [S, S] bf16 pre-transposed; packed: [8, S] f32."""
    N, S = x.shape
    full = lambda shape: pl.BlockSpec(shape, lambda: (0,) * len(shape))
    # TODO(synk): for large N, add a batch-tiled grid with a two-phase BN
    # reduction (accumulate per-feature sum/sumsq across tiles, then normalize)
    # so statistics still cover the full batch while x/h/out stream through
    # VMEM; mark the batch axis "parallel" for megacore on v7x.
    return pl.pallas_call(
        resblock_kernel,
        out_shape=jax.ShapeDtypeStruct((N, S), jnp.float32),
        in_specs=[
            full((N, S)),   # x (bf16)
            full((S, S)),   # W1^T (bf16)
            full((S, S)),   # W2^T (bf16)
            full((8, S)),   # packed BN affine params (f32)
        ],
        out_specs=full((N, S)),
        compiler_params=pltpu.CompilerParams(vmem_limit_bytes=32 * 1024 * 1024),
    )(x.astype(jnp.bfloat16), w1t, w2t, packed)


def resblock_ref(x, w1, b1, g1, be1, w2, b2, g2, be2):
    """Pure-JAX f32 reference matching the PyTorch forward (training-mode BN),
    *including* the linear biases that the kernel drops (BN cancels them)."""
    def bn(h, g, be):
        m = jnp.mean(h, axis=0, keepdims=True)
        v = jnp.mean((h - m) ** 2, axis=0, keepdims=True)
        return (h - m) / jnp.sqrt(v + EPS) * g + be

    h = x @ w1.T + b1
    h = jnp.maximum(bn(h, g1, be1), 0.0)
    h2 = h @ w2.T + b2
    return bn(h2, g2, be2)


if __name__ == "__main__":
    N, S = 8, 128  # ResBlock(size=128), batch of 8

    key = jax.random.PRNGKey(0)
    kx, kw1, kb1, kw2, kb2 = jax.random.split(key, 5)

    # Parameter init mimicking PyTorch nn.Linear defaults:
    # U(-1/sqrt(size), 1/sqrt(size)); BatchNorm affine: gamma=1, beta=0.
    bound = 1.0 / (S ** 0.5)
    x = jax.random.normal(kx, (N, S), dtype=jnp.float32)
    w1 = jax.random.uniform(kw1, (S, S), jnp.float32, -bound, bound)
    b1 = jax.random.uniform(kb1, (S,), jnp.float32, -bound, bound)
    w2 = jax.random.uniform(kw2, (S, S), jnp.float32, -bound, bound)
    b2 = jax.random.uniform(kb2, (S,), jnp.float32, -bound, bound)
    g1, be1 = jnp.ones((S,), jnp.float32), jnp.zeros((S,), jnp.float32)
    g2, be2 = jnp.ones((S,), jnp.float32), jnp.zeros((S,), jnp.float32)

    # One-time parameter prep (outside the per-call hot path).
    w1t, w2t, packed = prepare_resblock_params(w1, w2, g1, be1, g2, be2)

    out = jax.block_until_ready(resblock_forward(x, w1t, w2t, packed))

    ref = resblock_ref(x, w1, b1, g1, be1, w2, b2, g2, be2)
    # bf16 MXU operands => looser tolerance than the pure-f32 path.
    max_diff = float(jnp.max(jnp.abs(out - ref)))
    assert jnp.allclose(out, ref, atol=5e-2, rtol=5e-2), (
        "mismatch vs reference, max abs diff = %f" % max_diff)

    print("KERNEL_OK")
</pallas_src>

<mosaic_0001>
module attributes {stable_mosaic.version = 11 : i64} {
  func.func @resblock_kernel(%arg0: memref<8x128xbf16, #tpu.memory_space<vmem>>, %arg1: memref<128x128xbf16, #tpu.memory_space<vmem>>, %arg2: memref<128x128xbf16, #tpu.memory_space<vmem>>, %arg3: memref<8x128xf32, #tpu.memory_space<vmem>>, %arg4: memref<8x128xf32, #tpu.memory_space<vmem>>) attributes {dimension_semantics = [], scalar_prefetch = 0 : i64, scratch_operands = 0 : i64, tpu.core_type = #tpu.core_type<tc>} {
    %c0 = arith.constant 0 : index
    %c0_0 = arith.constant 0 : index
    %0 = vector.load %arg3[%c0, %c0_0] : memref<8x128xf32, #tpu.memory_space<vmem>>, vector<1x128xf32>
    %c1 = arith.constant 1 : index
    %c0_1 = arith.constant 0 : index
    %1 = vector.load %arg3[%c1, %c0_1] : memref<8x128xf32, #tpu.memory_space<vmem>>, vector<1x128xf32>
    %c2 = arith.constant 2 : index
    %c0_2 = arith.constant 0 : index
    %2 = vector.load %arg3[%c2, %c0_2] : memref<8x128xf32, #tpu.memory_space<vmem>>, vector<1x128xf32>
    %c3 = arith.constant 3 : index
    %c0_3 = arith.constant 0 : index
    %3 = vector.load %arg3[%c3, %c0_3] : memref<8x128xf32, #tpu.memory_space<vmem>>, vector<1x128xf32>
    %c0_4 = arith.constant 0 : index
    %c0_5 = arith.constant 0 : index
    %4 = vector.load %arg0[%c0_4, %c0_5] : memref<8x128xbf16, #tpu.memory_space<vmem>>, vector<8x128xbf16>
    %c0_6 = arith.constant 0 : index
    %c0_7 = arith.constant 0 : index
    %5 = vector.load %arg1[%c0_6, %c0_7] : memref<128x128xbf16, #tpu.memory_space<vmem>>, vector<128x128xbf16>
    %cst = arith.constant dense<0.000000e+00> : vector<8x128xf32>
    %6 = tpu.matmul %4, %5, %cst {dimension_numbers = #tpu.dot_dimension_numbers<[1], [0], [0], [1], [0, 0, 1, 1], [], []>} : vector<8x128xbf16>, vector<128x128xbf16>, vector<8x128xf32> -> vector<8x128xf32>
    %cst_8 = arith.constant dense<0.000000e+00> : vector<128xf32>
    %7 = vector.multi_reduction <add>, %6, %cst_8 [0] : vector<8x128xf32> to vector<128xf32>
    %8 = vector.shape_cast %7 : vector<128xf32> to vector<1x128xf32>
    %9 = arith.mulf %6, %6 : vector<8x128xf32>
    %cst_9 = arith.constant dense<0.000000e+00> : vector<128xf32>
    %10 = vector.multi_reduction <add>, %9, %cst_9 [0] : vector<8x128xf32> to vector<128xf32>
    %11 = vector.shape_cast %10 : vector<128xf32> to vector<1x128xf32>
    %cst_10 = arith.constant 1.250000e-01 : f32
    %12 = vector.broadcast %cst_10 : f32 to vector<1x128xf32>
    %13 = arith.mulf %8, %12 : vector<1x128xf32>
    %cst_11 = arith.constant 1.250000e-01 : f32
    %14 = vector.broadcast %cst_11 : f32 to vector<1x128xf32>
    %15 = arith.mulf %11, %14 : vector<1x128xf32>
    %16 = arith.mulf %13, %13 : vector<1x128xf32>
    %17 = arith.subf %15, %16 : vector<1x128xf32>
    %cst_12 = arith.constant 0.000000e+00 : f32
    %18 = vector.broadcast %cst_12 : f32 to vector<1x128xf32>
    %19 = arith.maximumf %17, %18 : vector<1x128xf32>
    %cst_13 = arith.constant 9.99999974E-6 : f32
    %20 = vector.broadcast %cst_13 : f32 to vector<1x128xf32>
    %21 = arith.addf %19, %20 : vector<1x128xf32>
    %22 = math.rsqrt %21 : vector<1x128xf32>
    %23 = arith.mulf %0, %22 : vector<1x128xf32>
    %24 = arith.mulf %13, %23 : vector<1x128xf32>
    %25 = arith.subf %1, %24 : vector<1x128xf32>
    %26 = vector.broadcast %23 : vector<1x128xf32> to vector<8x128xf32>
    %27 = arith.mulf %6, %26 : vector<8x128xf32>
    %28 = vector.broadcast %25 : vector<1x128xf32> to vector<8x128xf32>
    %29 = arith.addf %27, %28 : vector<8x128xf32>
    %cst_14 = arith.constant 0.000000e+00 : f32
    %30 = vector.broadcast %cst_14 : f32 to vector<8x128xf32>
    %31 = arith.maximumf %29, %30 : vector<8x128xf32>
    %32 = arith.truncf %31 : vector<8x128xf32> to vector<8x128xbf16>
    %c0_15 = arith.constant 0 : index
    %c0_16 = arith.constant 0 : index
    %33 = vector.load %arg2[%c0_15, %c0_16] : memref<128x128xbf16, #tpu.memory_space<vmem>>, vector<128x128xbf16>
    %cst_17 = arith.constant dense<0.000000e+00> : vector<8x128xf32>
    %34 = tpu.matmul %32, %33, %cst_17 {dimension_numbers = #tpu.dot_dimension_numbers<[1], [0], [0], [1], [0, 0, 1, 1], [], []>} : vector<8x128xbf16>, vector<128x128xbf16>, vector<8x128xf32> -> vector<8x128xf32>
    %cst_18 = arith.constant dense<0.000000e+00> : vector<128xf32>
    %35 = vector.multi_reduction <add>, %34, %cst_18 [0] : vector<8x128xf32> to vector<128xf32>
    %36 = vector.shape_cast %35 : vector<128xf32> to vector<1x128xf32>
    %37 = arith.mulf %34, %34 : vector<8x128xf32>
    %cst_19 = arith.constant dense<0.000000e+00> : vector<128xf32>
    %38 = vector.multi_reduction <add>, %37, %cst_19 [0] : vector<8x128xf32> to vector<128xf32>
    %39 = vector.shape_cast %38 : vector<128xf32> to vector<1x128xf32>
    %cst_20 = arith.constant 1.250000e-01 : f32
    %40 = vector.broadcast %cst_20 : f32 to vector<1x128xf32>
    %41 = arith.mulf %36, %40 : vector<1x128xf32>
    %cst_21 = arith.constant 1.250000e-01 : f32
    %42 = vector.broadcast %cst_21 : f32 to vector<1x128xf32>
    %43 = arith.mulf %39, %42 : vector<1x128xf32>
    %44 = arith.mulf %41, %41 : vector<1x128xf32>
    %45 = arith.subf %43, %44 : vector<1x128xf32>
    %cst_22 = arith.constant 0.000000e+00 : f32
    %46 = vector.broadcast %cst_22 : f32 to vector<1x128xf32>
    %47 = arith.maximumf %45, %46 : vector<1x128xf32>
    %cst_23 = arith.constant 9.99999974E-6 : f32
    %48 = vector.broadcast %cst_23 : f32 to vector<1x128xf32>
    %49 = arith.addf %47, %48 : vector<1x128xf32>
    %50 = math.rsqrt %49 : vector<1x128xf32>
    %51 = arith.mulf %2, %50 : vector<1x128xf32>
    %52 = arith.mulf %41, %51 : vector<1x128xf32>
    %53 = arith.subf %3, %52 : vector<1x128xf32>
    %54 = vector.broadcast %51 : vector<1x128xf32> to vector<8x128xf32>
    %55 = arith.mulf %34, %54 : vector<8x128xf32>
    %56 = vector.broadcast %53 : vector<1x128xf32> to vector<8x128xf32>
    %57 = arith.addf %55, %56 : vector<8x128xf32>
    %c0_24 = arith.constant 0 : index
    %c0_25 = arith.constant 0 : index
    %58 = vector.load %arg4[%c0_24, %c0_25] : memref<8x128xf32, #tpu.memory_space<vmem>>, vector<8x128xf32>
    tpu.vector_store %arg4[%c0_24, %c0_25], %57 {strides = array<i32>} : memref<8x128xf32, #tpu.memory_space<vmem>>, vector<8x128xf32>,
    return
  }
}

</mosaic_0001>

<llo_original>
// kernel: tpu_custom_call.1
$region0: #{tpu_custom_call.1}
  #allocation0 [shape = 'u32[]', space=smem, size = 0x4, offset = 0x4, fixed_abs, tag = 'smem constant byte address 0x4 - core index']
  #allocation1 [shape = 'u32[144,128]{1,0:T(1,128)}', space=vmem, size = 0x12000, scoped, tag = 'internal scratch']
  %s0 = inlined_call_operand.hbm [shape: bf16[8,128], index: 0, kind: input, shape index: {}]
  %s1 = inlined_call_operand.hbm [shape: bf16[128,128], index: 1, kind: input, shape index: {}]
  %s2 = inlined_call_operand.hbm [shape: bf16[128,128], index: 2, kind: input, shape index: {}]
  %s3 = inlined_call_operand.hbm [shape: f32[8,128], index: 3, kind: input, shape index: {}]
  %s4 = inlined_call_operand.hbm [shape: f32[8,128], index: 4, kind: output, shape index: {}]
  %s5 = sld [smem:[#allocation0]]
  $region42: #{tpu_custom_call.1} parent=0
    _
  %s7 = ssub.s32 1, %s5
  %s8 = scalar_select 0, %s7, %s5
  $region1: #{tpu_custom_call.1} parent=0
    #allocation2 [shape = 'u8[2048]{0}', space=vmem, size = 0x800, scoped, tag = 'input window, operand 0, single buffered']
    #allocation3 [shape = 's32[1]{0}', space=sflag, size = 0x4, scoped, tag = 'scoped memory for tpu_custom_call.1']
    #allocation4 [shape = 's32[1]{0}', space=sflag, size = 0x4, scoped, tag = 'scoped memory for tpu_custom_call.1']
    #allocation5 [shape = 'u8[32768]{0}', space=vmem, size = 0x8000, scoped, tag = 'input window, operand 1, single buffered']
    #allocation6 [shape = 's32[1]{0}', space=sflag, size = 0x4, scoped, tag = 'scoped memory for tpu_custom_call.1']
    #allocation7 [shape = 'u8[32768]{0}', space=vmem, size = 0x8000, scoped, tag = 'input window, operand 2, single buffered']
    #allocation8 [shape = 'u8[4096]{0}', space=vmem, size = 0x1000, scoped, tag = 'input window, operand 3, single buffered']
    #allocation9 [shape = 's32[1]{0}', space=sflag, size = 0x4, scoped, tag = 'scoped memory for tpu_custom_call.1']
    #allocation10 [shape = 'u8[4096]{0}', space=vmem, size = 0x1000, scoped, tag = 'output window, operand 0, single buffered']
    %9 = vsyncpa [#allocation3], 0
    %10 = vsyncpa [#allocation6], 0
    %11 = vsyncpa [#allocation9], 0
    %12 = vsyncpa [#allocation4], 0
    // Predicated region
    $region2: #{tpu_custom_call.1} parent=1 // pred_check
      _
    $region3: #{tpu_custom_call.1} parent=1 // pred_check_branch
      %14 = sbr.rel (0) target = $region5
    $region4: #{tpu_custom_call.1} parent=1 // pred_region
      %s16 = ssub.s32 64, 64
      %17 = vsyncadd [#allocation3], %s16
      %s19 = sshll.u32 [#allocation2], 4
      %s20 = int_to_ptr.vmem [resolvable:$true] %s19
      %22 = dma.hbm_to_vmem [thread:$0]  %s0, 64, %s20, [#allocation3]
    $region5: #{tpu_custom_call.1} parent=1 // pred_fallthru
      _
    // Predicated region
    $region6: #{tpu_custom_call.1} parent=1 // pred_check
      _
    $region7: #{tpu_custom_call.1} parent=1 // pred_check_branch
      %24 = sbr.rel (0) target = $region9
    $region8: #{tpu_custom_call.1} parent=1 // pred_region
      %s26 = ssub.s32 1024, 1024
      %27 = vsyncadd [#allocation6], %s26
      %s28 = sshll.u32 [#allocation5], 4
      %s29 = int_to_ptr.vmem [resolvable:$true] %s28
      %34 = dma.hbm_to_vmem [thread:$0]  %s1, 1024, %s29, [#allocation6], 64, 64, 4
    $region9: #{tpu_custom_call.1} parent=1 // pred_fallthru
      _
    // Predicated region
    $region10: #{tpu_custom_call.1} parent=1 // pred_check
      _
    $region11: #{tpu_custom_call.1} parent=1 // pred_check_branch
      %36 = sbr.rel (0) target = $region13
    $region12: #{tpu_custom_call.1} parent=1 // pred_region
      %s38 = ssub.s32 1024, 1024
      %39 = vsyncadd [#allocation6], %s38
      %s40 = sshll.u32 [#allocation7], 4
      %s41 = int_to_ptr.vmem [resolvable:$true] %s40
      %46 = dma.hbm_to_vmem [thread:$0]  %s2, 1024, %s41, [#allocation6], 64, 64, 4
    $region13: #{tpu_custom_call.1} parent=1 // pred_fallthru
      _
    // Predicated region
    $region14: #{tpu_custom_call.1} parent=1 // pred_check
      _
    $region15: #{tpu_custom_call.1} parent=1 // pred_check_branch
      %48 = sbr.rel (0) target = $region17
    $region16: #{tpu_custom_call.1} parent=1 // pred_region
      %s50 = ssub.s32 128, 128
      %51 = vsyncadd [#allocation9], %s50
      %s53 = sshll.u32 [#allocation8], 4
      %s54 = int_to_ptr.vmem [resolvable:$true] %s53
      %56 = dma.hbm_to_vmem [thread:$0]  %s3, 128, %s54, [#allocation9]
    $region17: #{tpu_custom_call.1} parent=1 // pred_fallthru
      _
    // Predicated region
    $region18: #{tpu_custom_call.1} parent=1 // pred_check
      _
    $region19: #{tpu_custom_call.1} parent=1 // pred_check_branch
      %58 = sbr.rel (0) target = $region21
    $region20: #{tpu_custom_call.1} parent=1 // pred_region
      %59 = dma.done [#allocation3], 64
    $region21: #{tpu_custom_call.1} parent=1 // pred_fallthru
      _
    // Predicated region
    $region22: #{tpu_custom_call.1} parent=1 // pred_check
      _
    $region23: #{tpu_custom_call.1} parent=1 // pred_check_branch
      %61 = sbr.rel (0) target = $region25
    $region24: #{tpu_custom_call.1} parent=1 // pred_region
      %62 = dma.done [#allocation6], 1024
    $region25: #{tpu_custom_call.1} parent=1 // pred_fallthru
      _
    // Predicated region
    $region26: #{tpu_custom_call.1} parent=1 // pred_check
      _
    $region27: #{tpu_custom_call.1} parent=1 // pred_check_branch
      %64 = sbr.rel (0) target = $region29
    $region28: #{tpu_custom_call.1} parent=1 // pred_region
      %65 = dma.done [#allocation6], 1024
    $region29: #{tpu_custom_call.1} parent=1 // pred_fallthru
      _
    // Predicated region
    $region30: #{tpu_custom_call.1} parent=1 // pred_check
      _
    $region31: #{tpu_custom_call.1} parent=1 // pred_check_branch
      %67 = sbr.rel (0) target = $region33
    $region32: #{tpu_custom_call.1} parent=1 // pred_region
      %68 = dma.done [#allocation9], 128
    $region33: #{tpu_custom_call.1} parent=1 // pred_fallthru
      _
    %v70 = vld [vmem:[#allocation8] sm:$0x1]
    %v71 = vld [vmem:[#allocation8 + $0x1] sm:$0x1]
    %v72 = vld [vmem:[#allocation8 + $0x2] sm:$0x1]
    %v73 = vld [vmem:[#allocation8 + $0x3] sm:$0x1]
    %v74 = vld [vmem:[#allocation2] sm:$0xf]
    %v75 = vld [vmem:[#allocation5] sm:$0xf]
    %v76 = vld [vmem:[#allocation5 + $0x4] sm:$0xf]
    %v77 = vld [vmem:[#allocation5 + $0x8] sm:$0xf]
    %v78 = vld [vmem:[#allocation5 + $0xc] sm:$0xf]
    %v79 = vld [vmem:[#allocation5 + $0x10] sm:$0xf]
    %v80 = vld [vmem:[#allocation5 + $0x14] sm:$0xf]
    %v81 = vld [vmem:[#allocation5 + $0x18] sm:$0xf]
    %v82 = vld [vmem:[#allocation5 + $0x1c] sm:$0xf]
    %v83 = vld [vmem:[#allocation5 + $0x20] sm:$0xf]
    %v84 = vld [vmem:[#allocation5 + $0x24] sm:$0xf]
    %v85 = vld [vmem:[#allocation5 + $0x28] sm:$0xf]
    %v86 = vld [vmem:[#allocation5 + $0x2c] sm:$0xf]
    %v87 = vld [vmem:[#allocation5 + $0x30] sm:$0xf]
    %v88 = vld [vmem:[#allocation5 + $0x34] sm:$0xf]
    %v89 = vld [vmem:[#allocation5 + $0x38] sm:$0xf]
    %v90 = vld [vmem:[#allocation5 + $0x3c] sm:$0xf]
    %v107 = vunpack.c.l.b16 %v75
    %v108 = vunpack.c.l.b16 %v76
    %v109 = vunpack.c.l.b16 %v77
    %v110 = vunpack.c.l.b16 %v78
    %v111 = vunpack.c.l.b16 %v79
    %v112 = vunpack.c.l.b16 %v80
    %v113 = vunpack.c.l.b16 %v81
    %v114 = vunpack.c.l.b16 %v82
    %v115 = vunpack.c.l.b16 %v83
    %v116 = vunpack.c.l.b16 %v84
    %v117 = vunpack.c.l.b16 %v85
    %v118 = vunpack.c.l.b16 %v86
    %v119 = vunpack.c.l.b16 %v87
    %v120 = vunpack.c.l.b16 %v88
    %v121 = vunpack.c.l.b16 %v89
    %v122 = vunpack.c.l.b16 %v90
    %v123 = vpack.c.b16 %v108, %v107
    %v124 = vpack.c.b16 %v110, %v109
    %v125 = vpack.c.b16 %v112, %v111
    %v126 = vpack.c.b16 %v114, %v113
    %v127 = vpack.c.b16 %v116, %v115
    %v128 = vpack.c.b16 %v118, %v117
    %v129 = vpack.c.b16 %v120, %v119
    %v130 = vpack.c.b16 %v122, %v121
    %139 = vmatprep.subr.bf16.mxu0 0
    %140 = vmatpush1.bf16.msra.mxu0 %v130
    %141 = vmatprep.subr.bf16.mxu0 0
    %142 = vmatpush1.bf16.msra.mxu0 %v129
    %143 = vmatprep.subr.bf16.mxu0 0
    %144 = vmatpush1.bf16.msra.mxu0 %v128
    %145 = vmatprep.subr.bf16.mxu0 0
    %146 = vmatpush1.bf16.msra.mxu0 %v127
    %147 = vmatprep.subr.bf16.mxu0 0
    %148 = vmatpush1.bf16.msra.mxu0 %v126
    %149 = vmatprep.subr.bf16.mxu0 0
    %150 = vmatpush1.bf16.msra.mxu0 %v125
    %151 = vmatprep.subr.bf16.mxu0 0
    %152 = vmatpush1.bf16.msra.mxu0 %v124
    %153 = vmatprep.subr.bf16.mxu0 0
    %154 = vmatpush1.bf16.msra.mxu0 %v123
    %155 = vmatprep.subr.bf16.mxu0 0
    %156 = vmatpush2.bf16.msra.mxu0 0
    %157 = vmatprep.subr.bf16.mxu0 0
    %158 = vmatpush2.bf16.msra.mxu0 0
    %159 = vmatprep.subr.bf16.mxu0 0
    %160 = vmatpush2.bf16.msra.mxu0 0
    %161 = vmatprep.subr.bf16.mxu0 0
    %162 = vmatpush2.bf16.msra.mxu0 0
    %163 = vmatprep.subr.bf16.mxu0 0
    %164 = vmatpush2.bf16.msra.mxu0 0
    %165 = vmatprep.subr.bf16.mxu0 0
    %166 = vmatpush2.bf16.msra.mxu0 0
    %167 = vmatprep.subr.bf16.mxu0 0
    %168 = vmatpush2.bf16.msra.mxu0 0
    %169 = vmatprep.subr.bf16.mxu0 0
    %170 = vmatpush2.bf16.msra.mxu0 0
    %171 = vmatprep.mubr.bf16.mxu0 0
    %172 = vmatmul.mubr.bf16.gmra.mxu0 %v74
    %v173 = vpop.f32.mrf.mxu0
    %v174 = vadd.f32 0.0, %v173
    %v175 = vpop.f32.mrf.mxu0
    %v176 = vpop.f32.mrf.mxu0
    %v177 = vpop.f32.mrf.mxu0
    %178 = vdwg.mxu0
    %v179 = vrot.slane %v174, 4
    %v180 = vadd.f32 %v174, %v179
    %v181 = vrot.slane %v180, 2
    %v182 = vadd.f32 %v180, %v181
    %v183 = vrot.slane %v182, 1
    %v184 = vadd.f32 %v182, %v183
    %v185 = vmul.f32 %v174, %v174
    %v186 = vrot.slane %v185, 4
    %v187 = vadd.f32 %v185, %v186
    %v188 = vrot.slane %v187, 2
    %v189 = vadd.f32 %v187, %v188
    %v190 = vrot.slane %v189, 1
    %v191 = vadd.f32 %v189, %v190
    %v192 = vmul.f32 %v184, 0.125
    %v193 = vmul.f32 %v191, 0.125
    %v194 = vmul.f32 %v192, %v192
    %v195 = vsub.f32 %v193, %v194
    %v196 = vmax.f32 %v195, 0.0
    %v197 = vadd.f32 %v196, 1e-05
    %v198 = vrsqrt.pop %v197
    %v199 = vmul.f32 %v70, %v198
    %v200 = vmul.f32 %v192, %v199
    %v201 = vsub.f32 %v71, %v200
    %v202 = vlaneseq
    %v203 = vshrl.u32 %v202, 7
    %v204 = vsub.s32 0, %v203
    %v205 = vrot.slane %v199, %v204
    %v206 = vmul.f32 %v174, %v205
    %v207 = vlaneseq
    %v208 = vshrl.u32 %v207, 7
    %v209 = vsub.s32 0, %v208
    %v210 = vrot.slane %v201, %v209
    %v211 = vadd.f32 %v206, %v210
    %v212 = vmax.f32 %v211, 0.0
    %v213 = vpack.c.bf16 %v212, %v212
    %v214 = vld [vmem:[#allocation7] sm:$0xf]
    %v215 = vld [vmem:[#allocation7 + $0x4] sm:$0xf]
    %v216 = vld [vmem:[#allocation7 + $0x8] sm:$0xf]
    %v217 = vld [vmem:[#allocation7 + $0xc] sm:$0xf]
    %v218 = vld [vmem:[#allocation7 + $0x10] sm:$0xf]
    %v219 = vld [vmem:[#allocation7 + $0x14] sm:$0xf]
    %v220 = vld [vmem:[#allocation7 + $0x18] sm:$0xf]
    %v221 = vld [vmem:[#allocation7 + $0x1c] sm:$0xf]
    %v222 = vld [vmem:[#allocation7 + $0x20] sm:$0xf]
    %v223 = vld [vmem:[#allocation7 + $0x24] sm:$0xf]
    %v224 = vld [vmem:[#allocation7 + $0x28] sm:$0xf]
    %v225 = vld [vmem:[#allocation7 + $0x2c] sm:$0xf]
    %v226 = vld [vmem:[#allocation7 + $0x30] sm:$0xf]
    %v227 = vld [vmem:[#allocation7 + $0x34] sm:$0xf]
    %v228 = vld [vmem:[#allocation7 + $0x38] sm:$0xf]
    %v229 = vld [vmem:[#allocation7 + $0x3c] sm:$0xf]
    %v246 = vunpack.c.l.b16 %v214
    %v247 = vunpack.c.l.b16 %v215
    %v248 = vunpack.c.l.b16 %v216
    %v249 = vunpack.c.l.b16 %v217
    %v250 = vunpack.c.l.b16 %v218
    %v251 = vunpack.c.l.b16 %v219
    %v252 = vunpack.c.l.b16 %v220
    %v253 = vunpack.c.l.b16 %v221
    %v254 = vunpack.c.l.b16 %v222
    %v255 = vunpack.c.l.b16 %v223
    %v256 = vunpack.c.l.b16 %v224
    %v257 = vunpack.c.l.b16 %v225
    %v258 = vunpack.c.l.b16 %v226
    %v259 = vunpack.c.l.b16 %v227
    %v260 = vunpack.c.l.b16 %v228
    %v261 = vunpack.c.l.b16 %v229
    %v262 = vpack.c.b16 %v247, %v246
    %v263 = vpack.c.b16 %v249, %v248
    %v264 = vpack.c.b16 %v251, %v250
    %v265 = vpack.c.b16 %v253, %v252
    %v266 = vpack.c.b16 %v255, %v254
    %v267 = vpack.c.b16 %v257, %v256
    %v268 = vpack.c.b16 %v259, %v258
    %v269 = vpack.c.b16 %v261, %v260
    %278 = vmatprep.subr.bf16.mxu0 0
    %279 = vmatpush1.bf16.msra.mxu0 %v269
    %280 = vmatprep.subr.bf16.mxu0 0
    %281 = vmatpush1.bf16.msra.mxu0 %v268
    %282 = vmatprep.subr.bf16.mxu0 0
    %283 = vmatpush1.bf16.msra.mxu0 %v267
    %284 = vmatprep.subr.bf16.mxu0 0
    %285 = vmatpush1.bf16.msra.mxu0 %v266
    %286 = vmatprep.subr.bf16.mxu0 0
    %287 = vmatpush1.bf16.msra.mxu0 %v265
    %288 = vmatprep.subr.bf16.mxu0 0
    %289 = vmatpush1.bf16.msra.mxu0 %v264
    %290 = vmatprep.subr.bf16.mxu0 0
    %291 = vmatpush1.bf16.msra.mxu0 %v263
    %292 = vmatprep.subr.bf16.mxu0 0
    %293 = vmatpush1.bf16.msra.mxu0 %v262
    %294 = vmatprep.subr.bf16.mxu0 0
    %295 = vmatpush2.bf16.msra.mxu0 0
    %296 = vmatprep.subr.bf16.mxu0 0
    %297 = vmatpush2.bf16.msra.mxu0 0
    %298 = vmatprep.subr.bf16.mxu0 0
    %299 = vmatpush2.bf16.msra.mxu0 0
    %300 = vmatprep.subr.bf16.mxu0 0
    %301 = vmatpush2.bf16.msra.mxu0 0
    %302 = vmatprep.subr.bf16.mxu0 0
    %303 = vmatpush2.bf16.msra.mxu0 0
    %304 = vmatprep.subr.bf16.mxu0 0
    %305 = vmatpush2.bf16.msra.mxu0 0
    %306 = vmatprep.subr.bf16.mxu0 0
    %307 = vmatpush2.bf16.msra.mxu0 0
    %308 = vmatprep.subr.bf16.mxu0 0
    %309 = vmatpush2.bf16.msra.mxu0 0
    %310 = vmatprep.mubr.bf16.mxu0 0
    %311 = vmatmul.mubr.bf16.gmra.mxu0 %v213
    %v312 = vpop.f32.mrf.mxu0
    %v313 = vadd.f32 0.0, %v312
    %v314 = vpop.f32.mrf.mxu0
    %v315 = vpop.f32.mrf.mxu0
    %v316 = vpop.f32.mrf.mxu0
    %317 = vdwg.mxu0
    %v318 = vrot.slane %v313, 4
    %v319 = vadd.f32 %v313, %v318
    %v320 = vrot.slane %v319, 2
    %v321 = vadd.f32 %v319, %v320
    %v322 = vrot.slane %v321, 1
    %v323 = vadd.f32 %v321, %v322
    %v324 = vmul.f32 %v313, %v313
    %v325 = vrot.slane %v324, 4
    %v326 = vadd.f32 %v324, %v325
    %v327 = vrot.slane %v326, 2
    %v328 = vadd.f32 %v326, %v327
    %v329 = vrot.slane %v328, 1
    %v330 = vadd.f32 %v328, %v329
    %v331 = vmul.f32 %v323, 0.125
    %v332 = vmul.f32 %v330, 0.125
    %v333 = vmul.f32 %v331, %v331
    %v334 = vsub.f32 %v332, %v333
    %v335 = vmax.f32 %v334, 0.0
    %v336 = vadd.f32 %v335, 1e-05
    %v337 = vrsqrt.pop %v336
    %v338 = vmul.f32 %v72, %v337
    %v339 = vmul.f32 %v331, %v338
    %v340 = vsub.f32 %v73, %v339
    %v341 = vlaneseq
    %v342 = vshrl.u32 %v341, 7
    %v343 = vsub.s32 0, %v342
    %v344 = vrot.slane %v338, %v343
    %v345 = vmul.f32 %v313, %v344
    %v346 = vlaneseq
    %v347 = vshrl.u32 %v346, 7
    %v348 = vsub.s32 0, %v347
    %v349 = vrot.slane %v340, %v348
    %v350 = vadd.f32 %v345, %v349
    %351 = vst [vmem:[#allocation10] sm:$0xff] %v350
    // Predicated region
    $region34: #{tpu_custom_call.1} parent=1 // pred_check
      _
    $region35: #{tpu_custom_call.1} parent=1 // pred_check_branch
      %353 = sbr.rel (0) target = $region37
    $region36: #{tpu_custom_call.1} parent=1 // pred_region
      %s355 = ssub.s32 128, 128
      %356 = vsyncadd [#allocation4], %s355
      %s358 = sshll.u32 [#allocation10], 4
      %s359 = int_to_ptr.vmem [resolvable:$true] %s358
      %361 = dma.vmem_to_hbm [thread:$0]  %s359, 128, %s4, [#allocation4]
    $region37: #{tpu_custom_call.1} parent=1 // pred_fallthru
      _
    // Predicated region
    $region38: #{tpu_custom_call.1} parent=1 // pred_check
      _
    $region39: #{tpu_custom_call.1} parent=1 // pred_check_branch
      %363 = sbr.rel (0) target = $region41
    $region40: #{tpu_custom_call.1} parent=1 // pred_region
      %364 = dma.done [#allocation4], 128
    $region41: #{tpu_custom_call.1} parent=1 // pred_fallthru
      _
    %365 = vsyncpa [#allocation3], 1
    %366 = vsyncpa [#allocation6], 1
    %367 = vsyncpa [#allocation9], 1
    %368 = vsyncpa [#allocation4], 1

</llo_original>
